<compile_context>
chip_gen: v5e
topology: v5e:2x2
jax: 0.10.0
libtpu: 0.0.40
codegen_flags: <defaults>
</compile_context>

<pallas_src>
import math

import jax
import jax.numpy as jnp
from jax.experimental import pallas as pl
from jax.experimental.pallas import tpu as pltpu

_MIB = 1024 * 1024


def nlinear_kernel(x_ref, w_ref, b_ref, o_ref):
    """x_ref: (L, T)  w_ref: (P, L)  b_ref: (P, 1)  o_ref: (P, T)."""
    x = x_ref[...]
    seq_last = x[x.shape[0] - 1:, :]                  # (1, T): last time step, per column
    y = jnp.dot(w_ref[...], x - seq_last,             # MXU matmul, f32 accumulation
                preferred_element_type=jnp.float32)
    o_ref[...] = (y + b_ref[...] + seq_last.astype(jnp.float32)).astype(o_ref.dtype)


def _vmem_capacity_bytes() -> int:
    default = 64 * _MIB                               # conservative (v7x per-TC VMEM)
    try:
        cap = pltpu.get_tpu_info().vmem_capacity_bytes
        return int(cap) if cap else default
    except Exception:
        return default


def _vmem_limit_bytes(capacity: int) -> int:
    # v5e/v6e (128 MiB physical) -> 64 MiB scoped; v7x (64 MiB) -> 48 MiB scoped.
    return max(32 * _MIB, min(capacity - 16 * _MIB, 64 * _MIB))


def _lane_tile_target(capacity: int, itemsize: int) -> int:
    if capacity >= 96 * _MIB:                         # v5e / v6e
        return 2048
    return 2048 if itemsize <= 2 else 1024            # v7x: tighter at f32


def _pick_lane_tile(extent: int, target: int, multiple: int = 128) -> int:
    if extent <= target:
        return extent                                 # full-extent block is always legal
    return max(multiple, (target // multiple) * multiple)


def _shrink_to_fit(t: int, L: int, P: int, in_isize: int, out_isize: int,
                   budget: int) -> int:
    """Shrink a 128-multiple lane tile until double-buffered tiles fit the budget."""
    def need(tt):
        return 2 * (L * tt * in_isize + P * tt * out_isize + P * L * in_isize + P * 4)
    while t > 128 and need(t) > budget:
        t = max(128, (t // 2) // 128 * 128)
    return t


def nlinear_forward(x, weight, bias, *, compute_dtype=None, min_direct_lanes=128):
    """NLinear forward.  x: [B, L, C], weight: [P, L], bias: [P] -> [B, P, C].

    compute_dtype: optional narrower dtype (e.g. jnp.bfloat16) for the x/weight
    operands; the matmul still accumulates in f32 and the output keeps x.dtype.
    """
    B, L, C = x.shape
    P = weight.shape[0]
    out_dtype = x.dtype
    cdt = jnp.dtype(compute_dtype) if compute_dtype is not None else jnp.dtype(x.dtype)

    w = weight.astype(cdt)                            # (P, L), resident in VMEM
    b2d = bias.reshape(P, 1).astype(jnp.float32)      # (P, 1), kept in f32
    xk = x if x.dtype == cdt else x.astype(cdt)

    capacity = _vmem_capacity_bytes()
    vmem_limit = _vmem_limit_bytes(capacity)
    target = _lane_tile_target(capacity, cdt.itemsize)
    budget = int(0.7 * vmem_limit)
    out_isize = jnp.dtype(out_dtype).itemsize

    if C >= min_direct_lanes:
        # ---- main path: native [B, L, C] layout, 2-D grid (batch, C tile) ----
        tc = _pick_lane_tile(C, target, 128)
        if tc % 128 == 0:
            tc = _shrink_to_fit(tc, L, P, cdt.itemsize, out_isize, budget)
        grid = (B, pl.cdiv(C, tc))
        return pl.pallas_call(
            nlinear_kernel,
            out_shape=jax.ShapeDtypeStruct((B, P, C), out_dtype),
            grid_spec=pltpu.PrefetchScalarGridSpec(
                num_scalar_prefetch=0,
                grid=grid,
                in_specs=[
                    pl.BlockSpec((pl.Squeezed(), L, tc), lambda b, j: (b, 0, j)),  # x tile
                    pl.BlockSpec((P, L), lambda b, j: (0, 0)),                     # weight (resident)
                    pl.BlockSpec((P, 1), lambda b, j: (0, 0)),                     # bias   (resident)
                ],
                out_specs=pl.BlockSpec((pl.Squeezed(), P, tc), lambda b, j: (b, 0, j)),
            ),
            compiler_params=pltpu.CompilerParams(
                dimension_semantics=("parallel", "parallel"),
                vmem_limit_bytes=vmem_limit,
            ),
        )(xk, w, b2d)

    # ---- fallback for small C (< 128 lanes): fuse batch*channel for density ----
    N = B * C
    mult = (C * 128) // math.gcd(C, 128)              # tile multiple of C and 128 if cheap
    mult = mult if mult <= target else 128
    tn = _pick_lane_tile(N, target, mult)
    if tn % 128 == 0:
        tn = _shrink_to_fit(tn, L, P, cdt.itemsize, out_isize, budget)
    x2d = jnp.transpose(xk, (1, 0, 2)).reshape(L, N)  # [L, B*C]; seq_last is still row L-1
    out2d = pl.pallas_call(
        nlinear_kernel,
        out_shape=jax.ShapeDtypeStruct((P, N), out_dtype),
        grid_spec=pltpu.PrefetchScalarGridSpec(
            num_scalar_prefetch=0,
            grid=(pl.cdiv(N, tn),),
            in_specs=[
                pl.BlockSpec((L, tn), lambda j: (0, j)),
                pl.BlockSpec((P, L), lambda j: (0, 0)),
                pl.BlockSpec((P, 1), lambda j: (0, 0)),
            ],
            out_specs=pl.BlockSpec((P, tn), lambda j: (0, j)),
        ),
        compiler_params=pltpu.CompilerParams(
            dimension_semantics=("parallel",),
            vmem_limit_bytes=vmem_limit,
        ),
    )(x2d, w, b2d)
    return out2d.reshape(P, B, C).transpose(1, 0, 2)


def nlinear_reference(x, weight, bias):
    """Pure-JAX reference mirroring the PyTorch forward exactly."""
    seq_last = x[:, -1:, :]
    xn = x - seq_last
    y = jnp.einsum("blc,pl->bpc", xn, weight) + bias[None, :, None]
    return y + seq_last


if __name__ == "__main__":
    def make_inputs(B, L, P, C, key):
        kx, kw, kb = jax.random.split(key, 3)
        x = jax.random.normal(kx, (B, L, C), dtype=jnp.float32)
        bound = 1.0 / (L ** 0.5)                      # nn.Linear-style init
        w = jax.random.uniform(kw, (P, L), minval=-bound, maxval=bound, dtype=jnp.float32)
        b = jax.random.uniform(kb, (P,), minval=-bound, maxval=bound, dtype=jnp.float32)
        return x, w, b

    # 1) Small-channel config (args.seq_len=8, args.pred_len=4, batch=2, channels=16)
    #    -> exercises the fused [L, B*C] fallback path.
    x, w, b = make_inputs(2, 8, 4, 16, jax.random.PRNGKey(0))
    out = jax.block_until_ready(nlinear_forward(x, w, b))
    ref = nlinear_reference(x, w, b)
    assert out.shape == (2, 4, 16), out.shape
    assert jnp.allclose(out, ref, atol=1e-4, rtol=1e-4), "fused-path mismatch"

    # 2) Wide-channel config -> exercises the main native-layout path.
    x2, w2, b2 = make_inputs(2, 8, 4, 128, jax.random.PRNGKey(1))
    out2 = jax.block_until_ready(nlinear_forward(x2, w2, b2))
    ref2 = nlinear_reference(x2, w2, b2)
    assert out2.shape == (2, 4, 128), out2.shape
    assert jnp.allclose(out2, ref2, atol=1e-4, rtol=1e-4), "direct-path mismatch"

    # 3) Opt-in bf16 operands (f32 accumulation) on the main path.
    out3 = jax.block_until_ready(
        nlinear_forward(x2, w2, b2, compute_dtype=jnp.bfloat16))
    assert out3.shape == (2, 4, 128), out3.shape
    assert jnp.allclose(out3, ref2, atol=1e-1, rtol=5e-2), "bf16-path mismatch"

    print("KERNEL_OK")
</pallas_src>

<mosaic_0001>
module attributes {stable_mosaic.version = 11 : i64} {
  func.func @nlinear_kernel(%arg0: i32, %arg1: memref<8x32xf32, #tpu.memory_space<vmem>>, %arg2: memref<4x8xf32, #tpu.memory_space<vmem>>, %arg3: memref<4x1xf32, #tpu.memory_space<vmem>>, %arg4: memref<4x32xf32, #tpu.memory_space<vmem>>) attributes {dimension_semantics = [#tpu.dimension_semantics<parallel>], iteration_bounds = array<i64: 1>, scalar_prefetch = 0 : i64, scratch_operands = 0 : i64, tpu.core_type = #tpu.core_type<tc>, window_params = [{transform_indices = @transform_0, window_bounds = array<i64: 8, 32>}, {pipeline_mode = #tpu.pipeline_mode<synchronous>, transform_indices = @transform_1, window_bounds = array<i64: 4, 8>}, {pipeline_mode = #tpu.pipeline_mode<synchronous>, transform_indices = @transform_2, window_bounds = array<i64: 4, 1>}, {transform_indices = @transform_3, window_bounds = array<i64: 4, 32>}]} {
    %c0 = arith.constant 0 : index
    %c0_0 = arith.constant 0 : index
    %0 = vector.load %arg1[%c0, %c0_0] : memref<8x32xf32, #tpu.memory_space<vmem>>, vector<8x32xf32>
    %1 = vector.extract_strided_slice %0 {offsets = [7, 0], sizes = [1, 32], strides = [1, 1]} : vector<8x32xf32> to vector<1x32xf32>
    %c0_1 = arith.constant 0 : index
    %c0_2 = arith.constant 0 : index
    %2 = vector.load %arg2[%c0_1, %c0_2] : memref<4x8xf32, #tpu.memory_space<vmem>>, vector<4x8xf32>
    %3 = vector.broadcast %1 : vector<1x32xf32> to vector<8x32xf32>
    %4 = arith.subf %0, %3 : vector<8x32xf32>
    %cst = arith.constant dense<0.000000e+00> : vector<4x32xf32>
    %5 = tpu.matmul %2, %4, %cst {dimension_numbers = #tpu.dot_dimension_numbers<[1], [0], [0], [1], [0, 0, 1, 1], [], []>} : vector<4x8xf32>, vector<8x32xf32>, vector<4x32xf32> -> vector<4x32xf32>
    %c0_3 = arith.constant 0 : index
    %c0_4 = arith.constant 0 : index
    %6 = vector.load %arg3[%c0_3, %c0_4] : memref<4x1xf32, #tpu.memory_space<vmem>>, vector<4x1xf32>
    %7 = vector.broadcast %6 : vector<4x1xf32> to vector<4x32xf32>
    %8 = arith.addf %5, %7 : vector<4x32xf32>
    %9 = vector.broadcast %1 : vector<1x32xf32> to vector<4x32xf32>
    %10 = arith.addf %8, %9 : vector<4x32xf32>
    %c0_5 = arith.constant 0 : index
    %c0_6 = arith.constant 0 : index
    %11 = vector.load %arg4[%c0_5, %c0_6] : memref<4x32xf32, #tpu.memory_space<vmem>>, vector<4x32xf32>
    tpu.vector_store %arg4[%c0_5, %c0_6], %10 {strides = array<i32>} : memref<4x32xf32, #tpu.memory_space<vmem>>, vector<4x32xf32>,
    return
  }
  func.func @transform_0(%arg0: i32) -> (i32, i32) {
    %c0_i32 = arith.constant 0 : i32
    %c0_i32_0 = arith.constant 0 : i32
    return %c0_i32, %arg0 : i32, i32
  }
  func.func @transform_1(%arg0: i32) -> (i32, i32) {
    %c0_i32 = arith.constant 0 : i32
    %c0_i32_0 = arith.constant 0 : i32
    %c0_i32_1 = arith.constant 0 : i32
    return %c0_i32, %c0_i32_0 : i32, i32
  }
  func.func @transform_2(%arg0: i32) -> (i32, i32) {
    %c0_i32 = arith.constant 0 : i32
    %c0_i32_0 = arith.constant 0 : i32
    %c0_i32_1 = arith.constant 0 : i32
    return %c0_i32, %c0_i32_0 : i32, i32
  }
  func.func @transform_3(%arg0: i32) -> (i32, i32) {
    %c0_i32 = arith.constant 0 : i32
    %c0_i32_0 = arith.constant 0 : i32
    return %c0_i32, %arg0 : i32, i32
  }
}

</mosaic_0001>

<llo_original>
// kernel: tpu_custom_call.1
$region0: #{tpu_custom_call.1}
  #allocation0 [shape = 'u32[]', space=smem, size = 0x4, offset = 0x4, fixed_abs, tag = 'smem constant byte address 0x4 - core index']
  #allocation1 [shape = 'u32[72,128]{1,0:T(1,128)}', space=vmem, size = 0x9000, scoped, tag = 'internal scratch']
  %s0 = inlined_call_operand.hbm [shape: f32[8,32], index: 0, kind: input, shape index: {}]
  %s1 = inlined_call_operand.vmem [shape: f32[4,8], index: 1, kind: input, shape index: {}]
  %s2 = inlined_call_operand.vmem [shape: f32[4,1], index: 2, kind: input, shape index: {}]
  %s3 = inlined_call_operand.hbm [shape: f32[4,32], index: 3, kind: output, shape index: {}]
  %s4 = sld [smem:[#allocation0]]
  $region26: #{tpu_custom_call.1} parent=0
    _
  %s6 = ssub.s32 1, %s4
  %s7 = scalar_select 0, %s6, %s4
  $region1: #{tpu_custom_call.1} parent=0
    #allocation2 [shape = 'u8[4096]{0}', space=vmem, size = 0x1000, scoped, tag = 'input window, operand 0, single buffered']
    #allocation3 [shape = 's32[1]{0}', space=sflag, size = 0x4, scoped, tag = 'scoped memory for tpu_custom_call.1']
    #allocation4 [shape = 's32[1]{0}', space=sflag, size = 0x4, scoped, tag = 'scoped memory for tpu_custom_call.1']
    #allocation5 [shape = 'u8[2048]{0}', space=vmem, size = 0x800, scoped, tag = 'output window, operand 0, single buffered']
    %8 = vsyncpa [#allocation3], 0
    %9 = vsyncpa [#allocation4], 0
    // Predicated region
    $region2: #{tpu_custom_call.1} parent=1 // pred_check
      _
    $region3: #{tpu_custom_call.1} parent=1 // pred_check_branch
      %11 = sbr.rel (0) target = $region5
    $region4: #{tpu_custom_call.1} parent=1 // pred_region
      %13 = vsyncadd [#allocation3], 0
      %s15 = sshll.u32 %s0, 4
      %s16 = int_to_ptr.hbm [resolvable:$true] %s15
      %s17 = sshll.u32 [#allocation2], 4
      %s18 = int_to_ptr.vmem [resolvable:$true] %s17
      %20 = dma.hbm_to_vmem [thread:$0]  %s16, 128, %s18, [#allocation3]
    $region5: #{tpu_custom_call.1} parent=1 // pred_fallthru
      _
    // Predicated region
    $region6: #{tpu_custom_call.1} parent=1 // pred_check
      _
    $region7: #{tpu_custom_call.1} parent=1 // pred_check_branch
      %22 = sbr.rel (0) target = $region9
    $region8: #{tpu_custom_call.1} parent=1 // pred_region
      _
    $region9: #{tpu_custom_call.1} parent=1 // pred_fallthru
      _
    // Predicated region
    $region10: #{tpu_custom_call.1} parent=1 // pred_check
      _
    $region11: #{tpu_custom_call.1} parent=1 // pred_check_branch
      %24 = sbr.rel (0) target = $region13
    $region12: #{tpu_custom_call.1} parent=1 // pred_region
      _
    $region13: #{tpu_custom_call.1} parent=1 // pred_fallthru
      _
    // Predicated region
    $region14: #{tpu_custom_call.1} parent=1 // pred_check
      _
    $region15: #{tpu_custom_call.1} parent=1 // pred_check_branch
      %26 = sbr.rel (0) target = $region17
    $region16: #{tpu_custom_call.1} parent=1 // pred_region
      %28 = dma.done [#allocation3], 128
    $region17: #{tpu_custom_call.1} parent=1 // pred_fallthru
      _
    %v29 = vld [vmem:[#allocation2] sm:$0xff]
    %v30 = vld [vmem:[%s1] sm:$0xf]
    %v31 = vperm.slane %v29, 7
    %v32 = vsub.f32 %v29, %v31
    %v33 = vld [vmem:[%s2] sm:$0xf]
    %35 = vset.pattern.permute.xlu0 0
    %36 = vperm.xlu0 %35, %v33
    %v37 = vpop.permute.xlu0 %36
    %vm39 = vcmask 64512
    %v41 = vsel %vm39, %v30, 0
    %43 = vmatpush.msra.mxu0 0.0
    %44 = vmatpush.msra.mxu0 0.0
    %45 = vmatpush.msra.mxu0 0.0
    %46 = vmatpush.msra.mxu0 0.0
    %47 = vmatpush.msra.mxu0 0.0
    %48 = vmatpush.msra.mxu0 0.0
    %49 = vmatpush.msra.mxu0 0.0
    %50 = vmatpush.msra.mxu0 0.0
    %51 = vmatpush.msra.mxu0 0.0
    %52 = vmatpush.msra.mxu0 0.0
    %53 = vmatpush.msra.mxu0 0.0
    %54 = vmatpush.msra.mxu0 0.0
    %55 = vmatpush.msra.mxu0 0.0
    %56 = vmatpush.msra.mxu0 0.0
    %57 = vmatpush.msra.mxu0 0.0
    %58 = vmatpush.msra.mxu0 %v32
    %59 = vmatmul.f32.gmra.mxu0 %v41
    %v60 = vpop.f32.mrf.mxu0
    %v61 = vadd.f32 %v37, %v60
    %62 = vdwg.mxu0
    %v63 = vadd.f32 %v61, %v31
    %vm64 = vcmask 257024
    %65 = vst.msk [vmem:[#allocation5] sm:$0xf] %vm64, %v63
    // Predicated region
    $region18: #{tpu_custom_call.1} parent=1 // pred_check
      _
    $region19: #{tpu_custom_call.1} parent=1 // pred_check_branch
      %67 = sbr.rel (0) target = $region21
    $region20: #{tpu_custom_call.1} parent=1 // pred_region
      %69 = vsyncadd [#allocation4], 0
      %s71 = sshll.u32 [#allocation5], 4
      %s72 = int_to_ptr.vmem [resolvable:$true] %s71
      %s73 = sshll.u32 %s3, 4
      %s74 = int_to_ptr.hbm [resolvable:$true] %s73
      %76 = dma.vmem_to_hbm [thread:$0]  %s72, 64, %s74, [#allocation4]
    $region21: #{tpu_custom_call.1} parent=1 // pred_fallthru
      _
    // Predicated region
    $region22: #{tpu_custom_call.1} parent=1 // pred_check
      _
    $region23: #{tpu_custom_call.1} parent=1 // pred_check_branch
      %78 = sbr.rel (0) target = $region25
    $region24: #{tpu_custom_call.1} parent=1 // pred_region
      %80 = dma.done [#allocation4], 64
    $region25: #{tpu_custom_call.1} parent=1 // pred_fallthru
      _
    %81 = vsyncpa [#allocation3], 1
    %82 = vsyncpa [#allocation4], 1

</llo_original>
